<compile_context>
chip_gen: v7x
topology: tpu7x:2x2x1
jax: 0.10.0
libtpu: 0.0.40
codegen_flags: <defaults>
</compile_context>

<pallas_src>
import jax
import jax.numpy as jnp
from jax.experimental import pallas as pl
from jax.experimental.pallas import tpu as pltpu

GAMMA = 1.5
ALPHA = 0.25
LANES = 128
TM_TARGET = 4096   # rows per block: 2 MiB f32 pred + 1 MiB bf16 true per block


def _focal_loss_partial_kernel(pred_ref, true_ref, out_ref):
    """One tile of elementwise focal-BCE -> lane-dense (8, 128) partial sum."""
    x = pred_ref[...].astype(jnp.float32)   # logits
    y = true_ref[...].astype(jnp.float32)   # targets in [0, 1]

    # exp(-|x|) computed once; reused by the softplus term and the sigmoid.
    e = jnp.exp(-jnp.abs(x))

    # BCEWithLogitsLoss(reduction='none'), numerically stable:
    #   max(x, 0) - x*y + log(1 + exp(-|x|))
    bce = jnp.maximum(x, 0.0) - x * y + jnp.log1p(e)

    # sigmoid(x) from the same e: sigmoid(|x|) = 1/(1+e); sigmoid(-|x|) = e/(1+e)
    sig_abs = 1.0 / (1.0 + e)
    pred_prob = jnp.where(x >= 0.0, sig_abs, e * sig_abs)

    # Focal modulation, exactly as in the PyTorch module (gamma = 1.5).
    p_t = y * pred_prob + (1.0 - y) * (1.0 - pred_prob)
    alpha_factor = y * ALPHA + (1.0 - y) * (1.0 - ALPHA)
    t = 1.0 - p_t
    modulating_factor = t * jnp.sqrt(t)     # t ** 1.5, safe at t == 0
    loss = bce * alpha_factor * modulating_factor

    # Reduce (tm, 128) -> (8, 128): sublane-aligned VPU adds only.
    tm, lanes = loss.shape
    out_ref[...] = jnp.sum(loss.reshape(tm // 8, 8, lanes), axis=0)


def focal_loss(pred, true, *, reduction="mean", cast_true_to_bf16=True):
    """Focal loss over arbitrary-shaped pred/true (same shape), mean/sum reduction."""
    assert pred.shape == true.shape
    total = pred.size

    x = pred.reshape(-1)
    y = true.reshape(-1)
    if cast_true_to_bf16:
        # Lossless for 0/1 targets; halves one HBM input stream.
        y = y.astype(jnp.bfloat16)

    # Tile-size selection: multiple-of-8 row tiles, minimal padding, tm <= TM_TARGET.
    rows = pl.cdiv(total, LANES)
    grid = pl.cdiv(rows, TM_TARGET)
    tm = pl.cdiv(pl.cdiv(rows, grid), 8) * 8
    grid = pl.cdiv(rows, tm)
    padded = grid * tm * LANES

    if padded != total:
        # Padding (pred=-100, true=0) contributes exactly 0 focal loss.
        x = jnp.pad(x, (0, padded - total), constant_values=-100.0)
        y = jnp.pad(y, (0, padded - total), constant_values=0.0)
    x2 = x.reshape(grid * tm, LANES)
    y2 = y.reshape(grid * tm, LANES)

    partials = pl.pallas_call(
        _focal_loss_partial_kernel,
        out_shape=jax.ShapeDtypeStruct((grid * 8, LANES), jnp.float32),
        grid_spec=pltpu.PrefetchScalarGridSpec(
            num_scalar_prefetch=0,
            grid=(grid,),
            in_specs=[
                pl.BlockSpec((tm, LANES), lambda i: (i, 0)),
                pl.BlockSpec((tm, LANES), lambda i: (i, 0)),
            ],
            out_specs=pl.BlockSpec((8, LANES), lambda i: (i, 0)),
        ),
        compiler_params=pltpu.CompilerParams(
            # Each step writes its own partial-sum block: safe to shard across
            # TensorCores (up to 2x on v7x; no effect on single-TC v5e/v6e).
            dimension_semantics=("parallel",),
        ),
    )(x2, y2)

    total_loss = jnp.sum(partials)
    if reduction == "mean":
        return total_loss / jnp.float32(total)
    elif reduction == "sum":
        return total_loss
    # TODO(synk): reduction='none' (elementwise loss output) not implemented.
    raise ValueError(f"unsupported reduction: {reduction}")


def focal_loss_ref(pred, true):
    """Pure-JAX reference mirroring the PyTorch module (mean reduction)."""
    x = pred.astype(jnp.float32)
    y = true.astype(jnp.float32)
    bce = jnp.maximum(x, 0.0) - x * y + jnp.log1p(jnp.exp(-jnp.abs(x)))
    p = jax.nn.sigmoid(x)
    p_t = y * p + (1 - y) * (1 - p)
    alpha_factor = y * ALPHA + (1 - y) * (1 - ALPHA)
    mod = (1.0 - p_t) ** GAMMA
    return jnp.mean(bce * alpha_factor * mod)


if __name__ == "__main__":
    key = jax.random.PRNGKey(0)
    k1, k2, k3, k4 = jax.random.split(key, 4)

    # NCHW objectness-style targets, matching the trainer's usage.
    B, C, H, W = 2, 4, 16, 16                       # 2048 elements
    pred = jax.random.normal(k1, (B, C, H, W), dtype=jnp.float32) * 2.0  # logits
    true = (jax.random.uniform(k2, (B, C, H, W)) > 0.7).astype(jnp.float32)

    out = jax.block_until_ready(focal_loss(pred, true))
    ref = jax.block_until_ready(focal_loss_ref(pred, true))
    assert jnp.allclose(out, ref, rtol=1e-5, atol=1e-6), (out, ref)

    # Awkward (non-multiple-of-128) size exercises the padded-tail path.
    shape2 = (3, 5, 7, 11)                          # 1155 elements
    pred2 = jax.random.normal(k3, shape2, dtype=jnp.float32) * 2.0
    true2 = (jax.random.uniform(k4, shape2) > 0.7).astype(jnp.float32)
    out2 = jax.block_until_ready(focal_loss(pred2, true2))
    ref2 = jax.block_until_ready(focal_loss_ref(pred2, true2))
    assert jnp.allclose(out2, ref2, rtol=1e-5, atol=1e-6), (out2, ref2)

    print("KERNEL_OK")
</pallas_src>

<mosaic_0001>
module attributes {stable_mosaic.version = 11 : i64} {
  func.func @_focal_loss_partial_kernel(%arg0: i32, %arg1: memref<16x128xf32, #tpu.memory_space<vmem>>, %arg2: memref<16x128xbf16, #tpu.memory_space<vmem>>, %arg3: memref<8x128xf32, #tpu.memory_space<vmem>>) attributes {dimension_semantics = [#tpu.dimension_semantics<parallel>], iteration_bounds = array<i64: 1>, scalar_prefetch = 0 : i64, scratch_operands = 0 : i64, tpu.core_type = #tpu.core_type<tc>, window_params = [{transform_indices = @transform_0, window_bounds = array<i64: 16, 128>}, {transform_indices = @transform_1, window_bounds = array<i64: 16, 128>}, {transform_indices = @transform_2, window_bounds = array<i64: 8, 128>}]} {
    %c0 = arith.constant 0 : index
    %c0_0 = arith.constant 0 : index
    %0 = vector.load %arg1[%c0, %c0_0] : memref<16x128xf32, #tpu.memory_space<vmem>>, vector<16x128xf32>
    %c0_1 = arith.constant 0 : index
    %c0_2 = arith.constant 0 : index
    %1 = vector.load %arg2[%c0_1, %c0_2] : memref<16x128xbf16, #tpu.memory_space<vmem>>, vector<16x128xbf16>
    %2 = arith.extf %1 : vector<16x128xbf16> to vector<16x128xf32>
    %3 = math.absf %0 : vector<16x128xf32>
    %cst = arith.constant 0.000000e+00 : f32
    %4 = vector.broadcast %cst : f32 to vector<16x128xf32>
    %5 = arith.subf %4, %3 : vector<16x128xf32>
    %6 = math.exp %5 : vector<16x128xf32>
    %cst_3 = arith.constant 0.000000e+00 : f32
    %7 = vector.broadcast %cst_3 : f32 to vector<16x128xf32>
    %8 = arith.maximumf %0, %7 : vector<16x128xf32>
    %9 = arith.mulf %0, %2 : vector<16x128xf32>
    %10 = arith.subf %8, %9 : vector<16x128xf32>
    %11 = math.log1p %6 : vector<16x128xf32>
    %12 = arith.addf %10, %11 : vector<16x128xf32>
    %cst_4 = arith.constant 1.000000e+00 : f32
    %13 = vector.broadcast %cst_4 : f32 to vector<16x128xf32>
    %14 = arith.addf %13, %6 : vector<16x128xf32>
    %cst_5 = arith.constant 1.000000e+00 : f32
    %15 = vector.broadcast %cst_5 : f32 to vector<16x128xf32>
    %16 = arith.divf %15, %14 : vector<16x128xf32>
    %cst_6 = arith.constant 0.000000e+00 : f32
    %17 = vector.broadcast %cst_6 : f32 to vector<16x128xf32>
    %18 = arith.cmpf oge, %0, %17 : vector<16x128xf32>
    %19 = arith.mulf %6, %16 : vector<16x128xf32>
    %20 = arith.select %18, %16, %19 : vector<16x128xi1>, vector<16x128xf32>
    %21 = arith.mulf %2, %20 : vector<16x128xf32>
    %cst_7 = arith.constant 1.000000e+00 : f32
    %22 = vector.broadcast %cst_7 : f32 to vector<16x128xf32>
    %23 = arith.subf %22, %2 : vector<16x128xf32>
    %cst_8 = arith.constant 1.000000e+00 : f32
    %24 = vector.broadcast %cst_8 : f32 to vector<16x128xf32>
    %25 = arith.subf %24, %20 : vector<16x128xf32>
    %26 = arith.mulf %23, %25 : vector<16x128xf32>
    %27 = arith.addf %21, %26 : vector<16x128xf32>
    %cst_9 = arith.constant 2.500000e-01 : f32
    %28 = vector.broadcast %cst_9 : f32 to vector<16x128xf32>
    %29 = arith.mulf %2, %28 : vector<16x128xf32>
    %cst_10 = arith.constant 1.000000e+00 : f32
    %30 = vector.broadcast %cst_10 : f32 to vector<16x128xf32>
    %31 = arith.subf %30, %2 : vector<16x128xf32>
    %cst_11 = arith.constant 7.500000e-01 : f32
    %32 = vector.broadcast %cst_11 : f32 to vector<16x128xf32>
    %33 = arith.mulf %31, %32 : vector<16x128xf32>
    %34 = arith.addf %29, %33 : vector<16x128xf32>
    %cst_12 = arith.constant 1.000000e+00 : f32
    %35 = vector.broadcast %cst_12 : f32 to vector<16x128xf32>
    %36 = arith.subf %35, %27 : vector<16x128xf32>
    %37 = math.sqrt %36 : vector<16x128xf32>
    %38 = arith.mulf %36, %37 : vector<16x128xf32>
    %39 = arith.mulf %12, %34 : vector<16x128xf32>
    %40 = arith.mulf %39, %38 : vector<16x128xf32>
    %41 = vector.shape_cast %40 : vector<16x128xf32> to vector<2x8x128xf32>
    %cst_13 = arith.constant dense<0.000000e+00> : vector<8x128xf32>
    %42 = vector.multi_reduction <add>, %41, %cst_13 [0] : vector<2x8x128xf32> to vector<8x128xf32>
    %c0_14 = arith.constant 0 : index
    %c0_15 = arith.constant 0 : index
    %43 = vector.load %arg3[%c0_14, %c0_15] : memref<8x128xf32, #tpu.memory_space<vmem>>, vector<8x128xf32>
    tpu.vector_store %arg3[%c0_14, %c0_15], %42 {strides = array<i32>} : memref<8x128xf32, #tpu.memory_space<vmem>>, vector<8x128xf32>,
    return
  }
  func.func @transform_0(%arg0: i32) -> (i32, i32) {
    %c0_i32 = arith.constant 0 : i32
    %c0_i32_0 = arith.constant 0 : i32
    return %arg0, %c0_i32 : i32, i32
  }
  func.func @transform_1(%arg0: i32) -> (i32, i32) {
    %c0_i32 = arith.constant 0 : i32
    %c0_i32_0 = arith.constant 0 : i32
    return %arg0, %c0_i32 : i32, i32
  }
  func.func @transform_2(%arg0: i32) -> (i32, i32) {
    %c0_i32 = arith.constant 0 : i32
    %c0_i32_0 = arith.constant 0 : i32
    return %arg0, %c0_i32 : i32, i32
  }
}

</mosaic_0001>

<llo_original>
// kernel: tpu_custom_call.1
$region0: #{tpu_custom_call.1}
  #allocation0 [shape = 'u32[]', space=smem, size = 0x4, offset = 0x4, fixed_abs, tag = 'smem constant byte address 0x4 - core index']
  #allocation1 [shape = 'u32[144,128]{1,0:T(1,128)}', space=vmem, size = 0x12000, scoped, tag = 'internal scratch']
  %s0 = inlined_call_operand.hbm [shape: f32[16,128], index: 0, kind: input, shape index: {}]
  %s1 = inlined_call_operand.hbm [shape: bf16[16,128], index: 1, kind: input, shape index: {}]
  %s2 = inlined_call_operand.hbm [shape: f32[8,128], index: 2, kind: output, shape index: {}]
  %s3 = sld [smem:[#allocation0]]
  $region26: #{tpu_custom_call.1} parent=0
    _
  %s5 = ssub.s32 1, %s3
  %s6 = scalar_select 0, %s5, %s3
  $region1: #{tpu_custom_call.1} parent=0
    #allocation2 [shape = 'u8[8192]{0}', space=vmem, size = 0x2000, scoped, tag = 'input window, operand 0, single buffered']
    #allocation3 [shape = 's32[1]{0}', space=sflag, size = 0x4, scoped, tag = 'scoped memory for tpu_custom_call.1']
    #allocation4 [shape = 's32[1]{0}', space=sflag, size = 0x4, scoped, tag = 'scoped memory for tpu_custom_call.1']
    #allocation5 [shape = 'u8[4096]{0}', space=vmem, size = 0x1000, scoped, tag = 'input window, operand 1, single buffered']
    #allocation6 [shape = 's32[1]{0}', space=sflag, size = 0x4, scoped, tag = 'scoped memory for tpu_custom_call.1']
    #allocation7 [shape = 'u8[4096]{0}', space=vmem, size = 0x1000, scoped, tag = 'output window, operand 0, single buffered']
    %7 = vsyncpa [#allocation3], 0
    %8 = vsyncpa [#allocation6], 0
    %9 = vsyncpa [#allocation4], 0
    // Predicated region
    $region2: #{tpu_custom_call.1} parent=1 // pred_check
      _
    $region3: #{tpu_custom_call.1} parent=1 // pred_check_branch
      %11 = sbr.rel (0) target = $region5
    $region4: #{tpu_custom_call.1} parent=1 // pred_region
      %s13 = ssub.s32 256, 256
      %14 = vsyncadd [#allocation3], %s13
      %s15 = sshll.u32 [#allocation2], 4
      %s16 = int_to_ptr.vmem [resolvable:$true] %s15
      %21 = dma.hbm_to_vmem [thread:$0]  %s0, 256, %s16, [#allocation3], 128, 128, 8
    $region5: #{tpu_custom_call.1} parent=1 // pred_fallthru
      _
    // Predicated region
    $region6: #{tpu_custom_call.1} parent=1 // pred_check
      _
    $region7: #{tpu_custom_call.1} parent=1 // pred_check_branch
      %23 = sbr.rel (0) target = $region9
    $region8: #{tpu_custom_call.1} parent=1 // pred_region
      %s25 = ssub.s32 128, 128
      %26 = vsyncadd [#allocation6], %s25
      %s27 = sshll.u32 [#allocation5], 4
      %s28 = int_to_ptr.vmem [resolvable:$true] %s27
      %33 = dma.hbm_to_vmem [thread:$0]  %s1, 128, %s28, [#allocation6], 64, 64, 4
    $region9: #{tpu_custom_call.1} parent=1 // pred_fallthru
      _
    // Predicated region
    $region10: #{tpu_custom_call.1} parent=1 // pred_check
      _
    $region11: #{tpu_custom_call.1} parent=1 // pred_check_branch
      %35 = sbr.rel (0) target = $region13
    $region12: #{tpu_custom_call.1} parent=1 // pred_region
      %36 = dma.done [#allocation3], 256
    $region13: #{tpu_custom_call.1} parent=1 // pred_fallthru
      _
    // Predicated region
    $region14: #{tpu_custom_call.1} parent=1 // pred_check
      _
    $region15: #{tpu_custom_call.1} parent=1 // pred_check_branch
      %38 = sbr.rel (0) target = $region17
    $region16: #{tpu_custom_call.1} parent=1 // pred_region
      %39 = dma.done [#allocation6], 128
    $region17: #{tpu_custom_call.1} parent=1 // pred_fallthru
      _
    %v40 = vld [vmem:[#allocation2] sm:$0xff]
    %v41 = vld [vmem:[#allocation2 + $0x8] sm:$0xff]
    %v42 = vld [vmem:[#allocation5] sm:$0xf]
    %v43 = vld [vmem:[#allocation5 + $0x4] sm:$0xf]
    %v44 = vunpack.c.l.bf16 %v42
    %v45 = vunpack.c.l.bf16 %v43
    %v46 = vand.u32 2147483647, %v40
    %v47 = vand.u32 2147483647, %v41
    %v48 = vsub.f32 0.0, %v46
    %v49 = vsub.f32 0.0, %v47
    %v50 = vmul.f32 %v48, 1.442695
    %v51 = vpow.pop %v50
    %v52 = vmul.f32 %v49, 1.442695
    %v53 = vpow.pop %v52
    %v54 = vmax.f32 %v40, 0.0
    %v55 = vmax.f32 %v41, 0.0
    %v56 = vmul.f32 %v40, %v44
    %v57 = vmul.f32 %v41, %v45
    %v58 = vsub.f32 %v54, %v56
    %v59 = vsub.f32 %v55, %v57
    %v60 = vadd.f32 %v51, 1.0
    %v61 = vlog2.pop %v60
    %v62 = vmul.f32 %v61, 0.6931472
    %v63 = vmul.f32 -0.5, %v51
    %v64 = vadd.f32 %v63, 1.0
    %v65 = vmul.f32 %v64, %v51
    %v66 = vand.u32 2147483647, %v51
    %vm67 = vcmp.lt.f32.partialorder %v66, 0.0004427343
    %v68 = vsel %vm67, %v65, %v62
    %v69 = vadd.f32 %v53, 1.0
    %v70 = vlog2.pop %v69
    %v71 = vmul.f32 %v70, 0.6931472
    %v72 = vmul.f32 -0.5, %v53
    %v73 = vadd.f32 %v72, 1.0
    %v74 = vmul.f32 %v73, %v53
    %v75 = vand.u32 2147483647, %v53
    %vm76 = vcmp.lt.f32.partialorder %v75, 0.0004427343
    %v77 = vsel %vm76, %v74, %v71
    %v78 = vadd.f32 %v58, %v68
    %v79 = vadd.f32 %v59, %v77
    %v80 = vadd.f32 %v51, 1.0
    %v81 = vadd.f32 %v53, 1.0
    %v82 = vrcp.pop %v80
    %v83 = vmul.f32 1.0, %v82
    %v84 = vrcp.pop %v81
    %v85 = vmul.f32 1.0, %v84
    %vm86 = vcmp.ge.f32.partialorder %v40, 0.0
    %vm87 = vcmp.ge.f32.partialorder %v41, 0.0
    %v88 = vmul.f32 %v51, %v83
    %v89 = vmul.f32 %v53, %v85
    %v90 = vsel %vm86, %v83, %v88
    %v91 = vsel %vm87, %v85, %v89
    %v92 = vmul.f32 %v44, %v90
    %v93 = vmul.f32 %v45, %v91
    %v94 = vsub.f32 1.0, %v44
    %v95 = vsub.f32 1.0, %v45
    %v96 = vsub.f32 1.0, %v90
    %v97 = vsub.f32 1.0, %v91
    %v98 = vmul.f32 %v94, %v96
    %v99 = vmul.f32 %v95, %v97
    %v100 = vadd.f32 %v92, %v98
    %v101 = vadd.f32 %v93, %v99
    %v102 = vmul.f32 %v44, 0.25
    %v103 = vmul.f32 %v45, 0.25
    %v104 = vmul.f32 %v94, 0.75
    %v105 = vmul.f32 %v95, 0.75
    %v106 = vadd.f32 %v102, %v104
    %v107 = vadd.f32 %v103, %v105
    %v108 = vsub.f32 1.0, %v100
    %v109 = vsub.f32 1.0, %v101
    %v110 = vrsqrt.pop %v108
    %v111 = vmul.f32 %v108, %v110
    %vm112 = vcmp.eq.f32.partialorder %v108, inf
    %v113 = vsel %vm112, %v108, %v111
    %vm114 = vcmp.eq.f32.partialorder %v108, 0.0
    %v115 = vand.u32 %v108, 2147483648
    %v116 = vsel %vm114, %v115, %v113
    %v117 = vrsqrt.pop %v109
    %v118 = vmul.f32 %v109, %v117
    %vm119 = vcmp.eq.f32.partialorder %v109, inf
    %v120 = vsel %vm119, %v109, %v118
    %vm121 = vcmp.eq.f32.partialorder %v109, 0.0
    %v122 = vand.u32 %v109, 2147483648
    %v123 = vsel %vm121, %v122, %v120
    %v124 = vmul.f32 %v108, %v116
    %v125 = vmul.f32 %v109, %v123
    %v126 = vmul.f32 %v78, %v106
    %v127 = vmul.f32 %v79, %v107
    %v128 = vmul.f32 %v126, %v124
    %v129 = vmul.f32 %v127, %v125
    %v130 = vadd.f32 %v128, %v129
    %131 = vst [vmem:[#allocation7] sm:$0xff] %v130
    // Predicated region
    $region18: #{tpu_custom_call.1} parent=1 // pred_check
      _
    $region19: #{tpu_custom_call.1} parent=1 // pred_check_branch
      %133 = sbr.rel (0) target = $region21
    $region20: #{tpu_custom_call.1} parent=1 // pred_region
      %s135 = ssub.s32 128, 128
      %136 = vsyncadd [#allocation4], %s135
      %s138 = sshll.u32 [#allocation7], 4
      %s139 = int_to_ptr.vmem [resolvable:$true] %s138
      %141 = dma.vmem_to_hbm [thread:$0]  %s139, 128, %s2, [#allocation4]
    $region21: #{tpu_custom_call.1} parent=1 // pred_fallthru
      _
    // Predicated region
    $region22: #{tpu_custom_call.1} parent=1 // pred_check
      _
    $region23: #{tpu_custom_call.1} parent=1 // pred_check_branch
      %143 = sbr.rel (0) target = $region25
    $region24: #{tpu_custom_call.1} parent=1 // pred_region
      %144 = dma.done [#allocation4], 128
    $region25: #{tpu_custom_call.1} parent=1 // pred_fallthru
      _
    %145 = vsyncpa [#allocation3], 1
    %146 = vsyncpa [#allocation6], 1
    %147 = vsyncpa [#allocation4], 1

</llo_original>
